<compile_context>
chip_gen: v5e
topology: v5e:2x2
jax: 0.10.0
libtpu: 0.0.40
codegen_flags: <defaults>
</compile_context>

<pallas_src>
import math
from functools import partial

import jax
import jax.numpy as jnp
import numpy as np
from jax import lax
from jax.experimental import pallas as pl
from jax.experimental.pallas import tpu as pltpu

_BINOMIAL = {
    1: [1.0],
    2: [1.0, 1.0],
    3: [1.0, 2.0, 1.0],
    4: [1.0, 3.0, 3.0, 1.0],
    5: [1.0, 4.0, 6.0, 4.0, 1.0],
    6: [1.0, 5.0, 10.0, 10.0, 5.0, 1.0],
    7: [1.0, 6.0, 15.0, 20.0, 15.0, 6.0, 1.0],
}

_PAD_MODE = {
    "reflect": "reflect",
    "refl": "reflect",
    "replicate": "edge",
    "repl": "edge",
    "zero": "constant",
}


def _make_filt2d(filt_size):
    a = np.asarray(_BINOMIAL[filt_size], dtype=np.float64)
    f = a[:, None] * a[None, :]
    return (f / f.sum()).astype(np.float32)


def _pad_src(j, n, mode):
    """Source index in [0, n) for padded coordinate j (may be out of range)."""
    if 0 <= j < n:
        return j
    if mode == "reflect":      # nn.ReflectionPad2d (no edge repetition)
        return -j if j < 0 else 2 * (n - 1) - j
    if mode == "edge":         # nn.ReplicationPad2d
        return 0 if j < 0 else n - 1
    return None                # zero pad: contributes nothing


def _folded_blur_matrices(filt_size, stride, H, W, top, bottom, left, right, mode):
    """Pad + blur + stride-subsample folded into A'^T (H,h_out) and B' (W,w_out)."""
    a = np.asarray(_BINOMIAL[filt_size], dtype=np.float64)
    norm = float(a.sum()) ** 2                      # sum of the 2D binomial filter
    h_out = (H + top + bottom - filt_size) // stride + 1
    w_out = (W + left + right - filt_size) // stride + 1

    A = np.zeros((h_out, H), dtype=np.float64)
    for i in range(h_out):
        for t in range(filt_size):
            src = _pad_src(stride * i + t - top, H, mode)
            if src is not None:
                A[i, src] += a[t]

    B = np.zeros((W, w_out), dtype=np.float64)
    for j in range(w_out):
        for t in range(filt_size):
            src = _pad_src(stride * j + t - left, W, mode)
            if src is not None:
                B[src, j] += a[t] / norm

    return A.T.copy(), B, h_out, w_out              # A'^T, B'


def _vmem_capacity_bytes():
    """Per-core VMEM capacity at trace time; conservative fallback = v7x/TC."""
    try:
        cap = int(pltpu.get_tpu_info().vmem_capacity_bytes)
        if cap > 0:
            return cap
    except Exception:
        pass
    return 64 * 1024 * 1024


def _blur_downsample_kernel(at_ref, b_ref, x_ref, o_ref, *, precision):
    # at_ref: (H, h_out)          folded (pad + row-blur + row-subsample)^T
    # b_ref : (W, w_out)          folded (pad + col-blur + col-subsample), normalized
    # x_ref : (TILE_BC, H, W)     unpadded planes (one (batch, channel) each)
    # o_ref : (TILE_BC, h_out, w_out)
    tile_bc, H, W = x_ref.shape
    h_out = at_ref.shape[1]
    w_out = b_ref.shape[1]

    x = x_ref[...]
    # Contract W: one big MXU matmul (M = TILE_BC*H).
    t = jnp.dot(x.reshape(tile_bc * H, W), b_ref[...],
                preferred_element_type=jnp.float32,
                precision=precision)                            # (TILE_BC*H, w_out)
    # Bring H to the minor position (data already W-reduced), contract H.
    t = jnp.swapaxes(t.reshape(tile_bc, H, w_out), 1, 2)        # (TILE_BC, w_out, H)
    at = at_ref[...].astype(jnp.float32)
    y = jnp.dot(t.reshape(tile_bc * w_out, H), at,
                preferred_element_type=jnp.float32,
                precision=precision)                            # (TILE_BC*w_out, h_out)
    y = jnp.swapaxes(y.reshape(tile_bc, w_out, h_out), 1, 2)    # (TILE_BC, h_out, w_out)
    o_ref[...] = y.astype(o_ref.dtype)


def downsample(x, *, pad_type="reflect", filt_size=3, stride=2, pad_off=0):
    """JAX/Pallas equivalent of Downsample(pad_type, filt_size, stride, C).forward(x)."""
    B, C, H, W = x.shape
    p_lo = int(1.0 * (filt_size - 1) / 2)
    p_hi = int(math.ceil(1.0 * (filt_size - 1) / 2.0))
    left, right, top, bottom = (p + pad_off for p in (p_lo, p_hi, p_lo, p_hi))
    mode = _PAD_MODE[pad_type]

    if mode == "reflect":
        # nn.ReflectionPad2d requires pad < spatial size; without this check
        # _pad_src would silently wrap instead of erroring like PyTorch.
        assert max(top, bottom) < H and max(left, right) < W, \
            "reflect padding must be smaller than the spatial dimensions"

    if filt_size == 1:
        # Pure subsampling path (no blur); plain slicing, no kernel needed.
        if pad_off == 0:
            return x[:, :, ::stride, ::stride]
        xp = jnp.pad(x, ((0, 0), (0, 0), (top, bottom), (left, right)), mode=mode)
        return xp[:, :, ::stride, ::stride]

    At, Bm, h_out, w_out = _folded_blur_matrices(
        filt_size, stride, H, W, top, bottom, left, right, mode)

    use_f32 = jnp.dtype(x.dtype) == jnp.float32
    precision = lax.Precision.HIGHEST if use_f32 else None   # free: kernel is HBM-bound
    mat_dtype = jnp.bfloat16 if x.dtype == jnp.bfloat16 else jnp.float32
    At_j = jnp.asarray(At.astype(np.float32), dtype=mat_dtype)
    Bm_j = jnp.asarray(Bm.astype(np.float32), dtype=mat_dtype)

    BC = B * C
    x_flat = x.reshape(BC, H, W)                                 # free reshape
    itemsize = jnp.dtype(x.dtype).itemsize

    # ---- generation-aware tiling ---------------------------------------
    vmem_cap = _vmem_capacity_bytes()                     # 128 MiB v5e/v6e, 64 MiB/TC v7x
    vmem_limit = min(64 * 1024 * 1024, (vmem_cap * 3) // 4)   # 64 MiB v5e/v6e, 48 MiB v7x
    ws_budget = int(vmem_limit * 0.8)                     # compiler-scratch headroom

    # Per-plane VMEM working set: double-buffered in/out blocks + the f32
    # intermediates (t, t^T, y, y^T + dtype cast) inside one kernel body.
    per_plane_ws = (2 * H * W * itemsize
                    + 3 * h_out * w_out * itemsize
                    + 2 * H * w_out * 4
                    + 2 * h_out * w_out * 4)
    plane_in_bytes = H * W * itemsize
    target_in_bytes = 8 * 1024 * 1024                     # 4-8 MiB amortizes ~0.35us/step

    tile_bc = max(1, min(BC,
                         target_in_bytes // max(plane_in_bytes, 1),
                         ws_budget // max(per_plane_ws, 1)))
    # Guarantee >=4 grid steps when BC allows: >=2 steps per TensorCore on v7x
    # (keeps DMA/compute double-buffering on both cores), harmless elsewhere.
    min_steps = min(4, BC)
    tile_bc = max(1, min(tile_bc, BC // min_steps))
    grid = (pl.cdiv(BC, tile_bc),)

    if per_plane_ws > ws_budget:
        # A single plane already exceeds the normal budget: hand it the rest of
        # VMEM (minus headroom) so medium-large images still compile at tile_bc=1.
        # TODO(synk): add an h_out-row-tiled second grid axis (overlapping x row
        # window) for planes that do not fit in VMEM even at tile_bc=1.
        vmem_limit = max(vmem_limit,
                         min(vmem_cap - 8 * 1024 * 1024,
                             per_plane_ws + 4 * 1024 * 1024))

    flop_scale = 6 if use_f32 else 1      # HIGHEST f32 uses the multi-pass MXU algorithm
    flops = flop_scale * 2 * BC * (H * W * w_out + w_out * H * h_out)
    bytes_accessed = itemsize * BC * (H * W + h_out * w_out) \
        + jnp.dtype(mat_dtype).itemsize * (H * h_out + W * w_out)

    kernel = partial(_blur_downsample_kernel, precision=precision)
    out = pl.pallas_call(
        kernel,
        out_shape=jax.ShapeDtypeStruct((BC, h_out, w_out), x.dtype),
        grid=grid,
        in_specs=[
            pl.BlockSpec((H, h_out), lambda i: (0, 0)),
            pl.BlockSpec((W, w_out), lambda i: (0, 0)),
            pl.BlockSpec((tile_bc, H, W), lambda i: (i, 0, 0)),
        ],
        out_specs=pl.BlockSpec((tile_bc, h_out, w_out), lambda i: (i, 0, 0)),
        compiler_params=pltpu.CompilerParams(
            dimension_semantics=("parallel",),
            vmem_limit_bytes=int(vmem_limit)),
        cost_estimate=pl.CostEstimate(
            flops=int(flops), transcendentals=0,
            bytes_accessed=int(bytes_accessed)),
    )(At_j, Bm_j, x_flat)

    return out.reshape(B, C, h_out, w_out)


def _conv_reference(x, pad_widths, pad_mode, filt_size, stride):
    """Depthwise conv2d on the padded input, mirroring the PyTorch module."""
    C = x.shape[1]
    filt2d = jnp.asarray(_make_filt2d(filt_size))
    w_dw = jnp.broadcast_to(filt2d[None, None, :, :], (C, 1, filt_size, filt_size))
    xp = jnp.pad(x, pad_widths, mode=pad_mode)
    return jax.lax.conv_general_dilated(
        xp, w_dw, window_strides=(stride, stride), padding="VALID",
        feature_group_count=C,
        dimension_numbers=("NCHW", "OIHW", "NCHW"),
        precision=jax.lax.Precision.HIGHEST)


if __name__ == "__main__":
    key = jax.random.PRNGKey(0)
    B, C, H, W = 2, 4, 16, 16
    x = jax.random.normal(key, (B, C, H, W), dtype=jnp.float32)

    # --- test 1: reflect pad, filt_size=3, stride=2 (module defaults) -------
    down = jax.jit(partial(downsample, pad_type="reflect", filt_size=3,
                           stride=2, pad_off=0))
    y = jax.block_until_ready(down(x))
    assert y.shape == (B, C, H // 2, W // 2), y.shape
    ref = _conv_reference(x, ((0, 0), (0, 0), (1, 1), (1, 1)), "reflect", 3, 2)
    # HIGHEST matmul precision inside the kernel -> tight tolerance.
    np.testing.assert_allclose(np.asarray(y), np.asarray(ref),
                               rtol=1e-4, atol=1e-5)

    # --- test 2: replicate pad, filt_size=5, stride=2 ------------------------
    down2 = jax.jit(partial(downsample, pad_type="replicate", filt_size=5,
                            stride=2, pad_off=0))
    y2 = jax.block_until_ready(down2(x))
    ref2 = _conv_reference(x, ((0, 0), (0, 0), (2, 2), (2, 2)), "edge", 5, 2)
    assert y2.shape == ref2.shape, (y2.shape, ref2.shape)
    np.testing.assert_allclose(np.asarray(y2), np.asarray(ref2),
                               rtol=1e-4, atol=1e-5)

    print("KERNEL_OK")
</pallas_src>

<mosaic_0001>
module attributes {stable_mosaic.version = 11 : i64} {
  func.func @_blur_downsample_kernel(%arg0: i32, %arg1: memref<16x8xf32, #tpu.memory_space<vmem>>, %arg2: memref<16x8xf32, #tpu.memory_space<vmem>>, %arg3: memref<2x16x16xf32, #tpu.memory_space<vmem>>, %arg4: memref<2x8x8xf32, #tpu.memory_space<vmem>>) attributes {dimension_semantics = [#tpu.dimension_semantics<parallel>], iteration_bounds = array<i64: 4>, scalar_prefetch = 0 : i64, scratch_operands = 0 : i64, tpu.core_type = #tpu.core_type<tc>, window_params = [{pipeline_mode = #tpu.pipeline_mode<synchronous>, transform_indices = @transform_0, window_bounds = array<i64: 16, 8>}, {pipeline_mode = #tpu.pipeline_mode<synchronous>, transform_indices = @transform_1, window_bounds = array<i64: 16, 8>}, {transform_indices = @transform_2, window_bounds = array<i64: 2, 16, 16>}, {transform_indices = @transform_3, window_bounds = array<i64: 2, 8, 8>}]} {
    %c0 = arith.constant 0 : index
    %c0_0 = arith.constant 0 : index
    %c0_1 = arith.constant 0 : index
    %0 = vector.load %arg3[%c0, %c0_0, %c0_1] : memref<2x16x16xf32, #tpu.memory_space<vmem>>, vector<2x16x16xf32>
    %1 = vector.shape_cast %0 : vector<2x16x16xf32> to vector<32x16xf32>
    %c0_2 = arith.constant 0 : index
    %c0_3 = arith.constant 0 : index
    %2 = vector.load %arg2[%c0_2, %c0_3] : memref<16x8xf32, #tpu.memory_space<vmem>>, vector<16x8xf32>
    %cst = arith.constant dense<0.000000e+00> : vector<32x8xf32>
    %3 = tpu.matmul %1, %2, %cst {dimension_numbers = #tpu.dot_dimension_numbers<[1], [0], [0], [1], [0, 0, 1, 1], [], []>, precision = #tpu.contract_precision<fp32>} : vector<32x16xf32>, vector<16x8xf32>, vector<32x8xf32> -> vector<32x8xf32>
    %4 = vector.shape_cast %3 : vector<32x8xf32> to vector<2x16x8xf32>
    %5 = tpu.transpose %4, [0, 2, 1] : vector<2x16x8xf32> -> vector<2x8x16xf32>
    %c0_4 = arith.constant 0 : index
    %c0_5 = arith.constant 0 : index
    %6 = vector.load %arg1[%c0_4, %c0_5] : memref<16x8xf32, #tpu.memory_space<vmem>>, vector<16x8xf32>
    %7 = vector.shape_cast %5 : vector<2x8x16xf32> to vector<16x16xf32>
    %cst_6 = arith.constant dense<0.000000e+00> : vector<16x8xf32>
    %8 = tpu.matmul %7, %6, %cst_6 {dimension_numbers = #tpu.dot_dimension_numbers<[1], [0], [0], [1], [0, 0, 1, 1], [], []>, precision = #tpu.contract_precision<fp32>} : vector<16x16xf32>, vector<16x8xf32>, vector<16x8xf32> -> vector<16x8xf32>
    %9 = vector.shape_cast %8 : vector<16x8xf32> to vector<2x8x8xf32>
    %10 = tpu.transpose %9, [0, 2, 1] : vector<2x8x8xf32> -> vector<2x8x8xf32>
    %c0_7 = arith.constant 0 : index
    %c0_8 = arith.constant 0 : index
    %c0_9 = arith.constant 0 : index
    %11 = vector.load %arg4[%c0_7, %c0_8, %c0_9] : memref<2x8x8xf32, #tpu.memory_space<vmem>>, vector<2x8x8xf32>
    tpu.vector_store %arg4[%c0_7, %c0_8, %c0_9], %10 {strides = array<i32>} : memref<2x8x8xf32, #tpu.memory_space<vmem>>, vector<2x8x8xf32>,
    return
  }
  func.func @transform_0(%arg0: i32) -> (i32, i32) {
    %c0_i32 = arith.constant 0 : i32
    %c0_i32_0 = arith.constant 0 : i32
    %c0_i32_1 = arith.constant 0 : i32
    return %c0_i32, %c0_i32_0 : i32, i32
  }
  func.func @transform_1(%arg0: i32) -> (i32, i32) {
    %c0_i32 = arith.constant 0 : i32
    %c0_i32_0 = arith.constant 0 : i32
    %c0_i32_1 = arith.constant 0 : i32
    return %c0_i32, %c0_i32_0 : i32, i32
  }
  func.func @transform_2(%arg0: i32) -> (i32, i32, i32) {
    %c0_i32 = arith.constant 0 : i32
    %c0_i32_0 = arith.constant 0 : i32
    %c0_i32_1 = arith.constant 0 : i32
    return %arg0, %c0_i32, %c0_i32_0 : i32, i32, i32
  }
  func.func @transform_3(%arg0: i32) -> (i32, i32, i32) {
    %c0_i32 = arith.constant 0 : i32
    %c0_i32_0 = arith.constant 0 : i32
    %c0_i32_1 = arith.constant 0 : i32
    return %arg0, %c0_i32, %c0_i32_0 : i32, i32, i32
  }
}

</mosaic_0001>

<llo_original>
// kernel: downsample.1
$region0: #{downsample.1}
  #allocation0 [shape = 'u32[]', space=smem, size = 0x4, offset = 0x4, fixed_abs, tag = 'smem constant byte address 0x4 - core index']
  #allocation1 [shape = 'u32[72,128]{1,0:T(1,128)}', space=vmem, size = 0x9000, scoped, tag = 'internal scratch']
  %s0 = inlined_call_operand.hbm [shape: f32[16,8], index: 0, kind: input, shape index: {}]
  %s1 = inlined_call_operand.hbm [shape: f32[16,8], index: 1, kind: input, shape index: {}]
  %s2 = inlined_call_operand.hbm [shape: f32[8,16,16], index: 2, kind: input, shape index: {}]
  %s3 = inlined_call_operand.hbm [shape: f32[8,8,8], index: 3, kind: output, shape index: {}]
  %s4 = sld [smem:[#allocation0]]
  $region57: #{downsample.1} parent=0
    _
  %s6 = ssub.s32 1, %s4
  %s7 = scalar_select 0, %s6, %s4
  $region1: #{downsample.1} parent=0
    #allocation2 [shape = 'u8[8192]{0}', space=vmem, size = 0x2000, scoped, tag = 'input window, operand 0, single buffered']
    #allocation3 [shape = 's32[2]{0}', space=sflag, size = 0x8, scoped, tag = 'scoped memory for downsample.1']
    #allocation4 [shape = 's32[2]{0}', space=sflag, size = 0x8, scoped, tag = 'scoped memory for downsample.1']
    #allocation5 [shape = 'u8[8192]{0}', space=vmem, size = 0x2000, scoped, tag = 'input window, operand 1, single buffered']
    #allocation6 [shape = 's32[1]{0}', space=sflag, size = 0x4, scoped, tag = 'scoped memory for downsample.1']
    #allocation7 [shape = 'u8[32768]{0}', space=vmem, size = 0x8000, scoped, tag = 'input window, operand 2']
    #allocation8 [shape = 'u8[16384]{0}', space=vmem, size = 0x4000, scoped, tag = 'output window, operand 0']
    %8 = vsyncpa [#allocation3], 0
    %9 = vsyncpa [#allocation6], 0
    %10 = vsyncpa [#allocation4], 0
    %s11 = scalar_lea.sflag [#allocation4], 1
    %12 = vsyncpa %s11, 0
    loop: start=0, step=1, limit=6
    $region2: #{downsample.1} parent=1 // loop_pre_header
      _
    $region3: #{downsample.1} parent=1 // loop_header
      %s14 = sphi 0, %s18
      %p15 = scmp.ge.s32.totalorder %s14, 6
      %s22 = sphi 0, %s22
      %s24 = sphi 0, %s22
      %s25 = sphi 0, %s24
      %s39 = sphi 0, %s25
      %s43 = sphi 0, %s43
      %s45 = sphi 0, %s43
      %s46 = sphi 0, %s45
      %s60 = sphi 0, %s46
      %s66 = sphi 0, %s68
      %s69 = sphi 0, %s66
      %s70 = sphi 0, %s69
      %s86 = sphi 0, %s70
      %s92 = sphi 0, %s94
      %s95 = sphi 0, %s92
      %s96 = sphi 0, %s95
      %s112 = sphi 0, %s96
    $region4: #{downsample.1} parent=1 // loop_header_branch
      %17 = sbr.rel (%p15) target = $region8
    $region5: #{downsample.1} parent=1 // loop_body
      %s19 = ssub.s32 %s14, 1
      %s20 = ssub.s32 %s14, 2
      %s21 = sadd.s32 %s14, 1
      %s23 = sadd.s32 %s22, 1
      %p26 = scmp.eq.s32.totalorder %s14, 3
      %p27 = scmp.ne.s32.totalorder %s22, %s24
      %p28 = scmp.eq.s32.totalorder %s14, 0
      %p29 = por %p27, %p28
      %p30 = scmp.ne.s32.totalorder %s22, %s24
      %p31 = scmp.eq.s32.totalorder %s19, 3
      %p32 = por %p30, %p31
      %p33 = scmp.ne.s32.totalorder %s24, %s25
      %p34 = scmp.eq.s32.totalorder %s19, 0
      %p35 = por %p33, %p34
      %p36 = scmp.ne.s32.totalorder %s24, %s25
      %p37 = scmp.eq.s32.totalorder %s20, 3
      %p38 = por %p36, %p37
      %p40 = scmp.ne.s32.totalorder %s25, %s39
      %p41 = scmp.eq.s32.totalorder %s20, 0
      %p42 = por %p40, %p41
      %s44 = sadd.s32 %s43, 1
      %p47 = scmp.eq.s32.totalorder %s14, 3
      %p48 = scmp.ne.s32.totalorder %s43, %s45
      %p49 = scmp.eq.s32.totalorder %s14, 0
      %p50 = por %p48, %p49
      %p51 = scmp.ne.s32.totalorder %s43, %s45
      %p52 = scmp.eq.s32.totalorder %s19, 3
      %p53 = por %p51, %p52
      %p54 = scmp.ne.s32.totalorder %s45, %s46
      %p55 = scmp.eq.s32.totalorder %s19, 0
      %p56 = por %p54, %p55
      %p57 = scmp.ne.s32.totalorder %s45, %s46
      %p58 = scmp.eq.s32.totalorder %s20, 3
      %p59 = por %p57, %p58
      %p61 = scmp.ne.s32.totalorder %s46, %s60
      %p62 = scmp.eq.s32.totalorder %s20, 0
      %p63 = por %p61, %p62
      %s64 = ssub.s32 %s14, %s21
      %p65 = scmp.eq.s32.totalorder %s64, 0
      %s67 = sadd.s32 %s66, 1
      %s68 = scalar_select %p65, %s66, %s67
      %p71 = pneg %p65
      %p72 = scmp.eq.s32.totalorder %s14, 3
      %p73 = por %p71, %p72
      %p74 = scmp.ne.s32.totalorder %s66, %s69
      %p75 = scmp.eq.s32.totalorder %s14, 0
      %p76 = por %p74, %p75
      %p77 = scmp.ne.s32.totalorder %s66, %s69
      %p78 = scmp.eq.s32.totalorder %s19, 3
      %p79 = por %p77, %p78
      %p80 = scmp.ne.s32.totalorder %s69, %s70
      %p81 = scmp.eq.s32.totalorder %s19, 0
      %p82 = por %p80, %p81
      %p83 = scmp.ne.s32.totalorder %s69, %s70
      %p84 = scmp.eq.s32.totalorder %s20, 3
      %p85 = por %p83, %p84
      %p87 = scmp.ne.s32.totalorder %s70, %s86
      %p88 = scmp.eq.s32.totalorder %s20, 0
      %p89 = por %p87, %p88
      %s90 = ssub.s32 %s14, %s21
      %p91 = scmp.eq.s32.totalorder %s90, 0
      %s93 = sadd.s32 %s92, 1
      %s94 = scalar_select %p91, %s92, %s93
      %p97 = pneg %p91
      %p98 = scmp.eq.s32.totalorder %s14, 3
      %p99 = por %p97, %p98
      %p100 = scmp.ne.s32.totalorder %s92, %s95
      %p101 = scmp.eq.s32.totalorder %s14, 0
      %p102 = por %p100, %p101
      %p103 = scmp.ne.s32.totalorder %s92, %s95
      %p104 = scmp.eq.s32.totalorder %s19, 3
      %p105 = por %p103, %p104
      %p106 = scmp.ne.s32.totalorder %s95, %s96
      %p107 = scmp.eq.s32.totalorder %s19, 0
      %p108 = por %p106, %p107
      %p109 = scmp.ne.s32.totalorder %s95, %s96
      %p110 = scmp.eq.s32.totalorder %s20, 3
      %p111 = por %p109, %p110
      %p113 = scmp.ne.s32.totalorder %s96, %s112
      %p114 = scmp.eq.s32.totalorder %s20, 0
      %p115 = por %p113, %p114
      %p116 = scmp.le.s32.totalorder 1, %s14
      %p117 = scmp.lt.s32.totalorder %s14, 5
      %p118 = pnand %p116, %p117
      %p119 = pneg %p118
      // Predicated region
      $region9: #{downsample.1} parent=5 // pred_check
        _
      $region10: #{downsample.1} parent=5 // pred_check_branch
        %121 = sbr.rel (%p118) target = $region12
      $region11: #{downsample.1} parent=5 // pred_region
        %s122 = ssub.s32 %s14, 1
        // Predicated region
        $region13: #{downsample.1} parent=11 // pred_check
          %p123 = pneg %p35
        $region14: #{downsample.1} parent=11 // pred_check_branch
          %125 = sbr.rel (%p123) target = $region16
        $region15: #{downsample.1} parent=11 // pred_region
          %127 = vsyncadd [#allocation3], 0
          %s128 = sshll.u32 %s0, 4
          %s129 = int_to_ptr.hbm [resolvable:$true] %s128
          %s130 = sshll.u32 [#allocation2], 4
          %s131 = int_to_ptr.vmem [resolvable:$true] %s130
          %136 = dma.hbm_to_vmem [thread:$0]  %s129, 256, %s131, [#allocation3], 128, 128, 8
        $region16: #{downsample.1} parent=11 // pred_fallthru
          _
        // Predicated region
        $region17: #{downsample.1} parent=11 // pred_check
          %p137 = pneg %p56
        $region18: #{downsample.1} parent=11 // pred_check_branch
          %139 = sbr.rel (%p137) target = $region20
        $region19: #{downsample.1} parent=11 // pred_region
          %141 = vsyncadd [#allocation6], 0
          %s142 = sshll.u32 %s1, 4
          %s143 = int_to_ptr.hbm [resolvable:$true] %s142
          %s144 = sshll.u32 [#allocation5], 4
          %s145 = int_to_ptr.vmem [resolvable:$true] %s144
          %150 = dma.hbm_to_vmem [thread:$0]  %s143, 256, %s145, [#allocation6], 128, 128, 8
        $region20: #{downsample.1} parent=11 // pred_fallthru
          _
      $region12: #{downsample.1} parent=5 // pred_fallthru
        _
      %p151 = scmp.lt.s32.totalorder %s14, 4
      // Predicated region
      $region21: #{downsample.1} parent=5 // pred_check
        %p152 = pneg %p151
      $region22: #{downsample.1} parent=5 // pred_check_branch
        %154 = sbr.rel (%p152) target = $region24
      $region23: #{downsample.1} parent=5 // pred_region
        // Predicated region
        $region25: #{downsample.1} parent=23 // pred_check
          %p155 = pneg %p76
        $region26: #{downsample.1} parent=23 // pred_check_branch
          %157 = sbr.rel (%p155) target = $region28
        $region27: #{downsample.1} parent=23 // pred_region
          %s158 = sand.u32 %s14, 1
          %s159 = scalar_lea.sflag [#allocation3], %s158
          %s160 = sand.u32 %s66, 1
          %s161 = smul.addr %s160, 32
          %s162 = scalar_lea.vmem [#allocation7], %s161
          %s163 = smul.u32 2, %s14
          %165 = vsyncadd %s159, 0
          %s166 = smul.addr %s163, 2
          %s167 = smul.addr %s166, 8
          %s168 = scalar_lea.hbm %s2, %s167
          %s169 = sshll.u32 %s168, 4
          %s170 = int_to_ptr.hbm [resolvable:$true] %s169
          %s171 = sshll.u32 %s162, 4
          %s172 = int_to_ptr.vmem [resolvable:$true] %s171
          %177 = dma.hbm_to_vmem [thread:$0]  %s170, 512, %s172, %s159, 128, 128, 8
        $region28: #{downsample.1} parent=23 // pred_fallthru
          _
      $region24: #{downsample.1} parent=5 // pred_fallthru
        _
      %p178 = scmp.le.s32.totalorder 1, %s14
      %p179 = scmp.lt.s32.totalorder %s14, 5
      %p180 = pnand %p178, %p179
      %p181 = pneg %p180
      // Predicated region
      $region29: #{downsample.1} parent=5 // pred_check
        _
      $region30: #{downsample.1} parent=5 // pred_check_branch
        %183 = sbr.rel (%p180) target = $region32
      $region31: #{downsample.1} parent=5 // pred_region
        %s184 = ssub.s32 %s14, 1
        // Predicated region
        $region33: #{downsample.1} parent=31 // pred_check
          %p185 = pneg %p35
        $region34: #{downsample.1} parent=31 // pred_check_branch
          %187 = sbr.rel (%p185) target = $region36
        $region35: #{downsample.1} parent=31 // pred_region
          %189 = dma.done [#allocation3], 256
        $region36: #{downsample.1} parent=31 // pred_fallthru
          _
        // Predicated region
        $region37: #{downsample.1} parent=31 // pred_check
          %p190 = pneg %p56
        $region38: #{downsample.1} parent=31 // pred_check_branch
          %192 = sbr.rel (%p190) target = $region40
        $region39: #{downsample.1} parent=31 // pred_region
          %194 = dma.done [#allocation6], 256
        $region40: #{downsample.1} parent=31 // pred_fallthru
          _
        %s195 = sand.u32 %s19, 1
        %s196 = scalar_lea.sflag [#allocation3], %s195
        %s197 = sand.u32 %s69, 1
        %s198 = smul.addr %s197, 32
        %s199 = scalar_lea.vmem [#allocation7], %s198
        // Predicated region
        $region41: #{downsample.1} parent=31 // pred_check
          %p200 = pneg %p82
        $region42: #{downsample.1} parent=31 // pred_check_branch
          %202 = sbr.rel (%p200) target = $region44
        $region43: #{downsample.1} parent=31 // pred_region
          %204 = dma.done %s196, 512
        $region44: #{downsample.1} parent=31 // pred_fallthru
          _
        %p205 = pneg %p35
        %p206 = pneg %p32
        %p207 = pneg %p56
        %p208 = pneg %p53
        %s209 = sand.u32 %s19, 1
        %s210 = scalar_lea.sflag [#allocation3], %s209
        %s211 = sand.u32 %s69, 1
        %s212 = smul.addr %s211, 32
        %s213 = scalar_lea.vmem [#allocation7], %s212
        %p214 = pneg %p82
        %p215 = pneg %p79
        %p216 = pneg %p108
        %p217 = pneg %p105
        %s218 = sand.u32 %s95, 1
        %s219 = scalar_lea.sflag [#allocation4], %s218
        %s220 = sand.u32 %s95, 1
        %s221 = smul.addr %s220, 16
        %s222 = scalar_lea.vmem [#allocation8], %s221
        %s223 = smul.u32 2, %s19
        %s224 = smul.u32 2, %s19
        %v225 = vld [vmem:[%s199] sm:$0xff]
        %v226 = vld [vmem:[%s199 + $0x8] sm:$0xff]
        %v227 = vld [vmem:[%s199 + $0x10] sm:$0xff]
        %v228 = vld [vmem:[%s199 + $0x18] sm:$0xff]
        %v229 = vld [vmem:[#allocation5] sm:$0xff]
        %v230 = vld [vmem:[#allocation5 + $0x8] sm:$0xff]
        %vm231 = vcmask 130048
        %v233 = vsel %vm231, %v225, 0
        %v236 = vsel %vm231, %v226, 0
        %v239 = vsel %vm231, %v227, 0
        %v242 = vsel %vm231, %v228, 0
        %244 = vmatpush.msra.mxu0 0.0
        %245 = vmatpush.msra.mxu0 0.0
        %246 = vmatpush.msra.mxu0 0.0
        %247 = vmatpush.msra.mxu0 0.0
        %248 = vmatpush.msra.mxu0 0.0
        %249 = vmatpush.msra.mxu0 0.0
        %250 = vmatpush.msra.mxu0 0.0
        %251 = vmatpush.msra.mxu0 0.0
        %252 = vmatpush.msra.mxu0 0.0
        %253 = vmatpush.msra.mxu0 0.0
        %254 = vmatpush.msra.mxu0 0.0
        %255 = vmatpush.msra.mxu0 0.0
        %256 = vmatpush.msra.mxu0 0.0
        %257 = vmatpush.msra.mxu0 0.0
        %v258 = vand.u32 %v230, 4294901760
        %259 = vmatpush.msra.mxu0 %v258
        %v260 = vand.u32 %v229, 4294901760
        %261 = vmatpush.msra.mxu0 %v260
        %v262 = vand.u32 %v233, 4294901760
        %v263 = vsub.f32 %v233, %v262
        %v264 = vand.u32 %v263, 4294901760
        %v265 = vsub.f32 %v263, %v264
        %v266 = vand.u32 %v265, 4294901760
        %267 = vmatmul.f32.gmra.mxu0 %v266
        %v268 = vpop.f32.mrf.mxu0
        %v269 = vadd.f32 0.0, %v268
        %v270 = vand.u32 %v236, 4294901760
        %v271 = vsub.f32 %v236, %v270
        %v272 = vand.u32 %v271, 4294901760
        %v273 = vsub.f32 %v271, %v272
        %v274 = vand.u32 %v273, 4294901760
        %275 = vmatmul.f32.gmra.mxu0 %v274
        %v276 = vpop.f32.mrf.mxu0
        %v277 = vadd.f32 0.0, %v276
        %v278 = vand.u32 %v239, 4294901760
        %v279 = vsub.f32 %v239, %v278
        %v280 = vand.u32 %v279, 4294901760
        %v281 = vsub.f32 %v279, %v280
        %v282 = vand.u32 %v281, 4294901760
        %283 = vmatmul.f32.gmra.mxu0 %v282
        %v284 = vpop.f32.mrf.mxu0
        %v285 = vadd.f32 0.0, %v284
        %v286 = vand.u32 %v242, 4294901760
        %v287 = vsub.f32 %v242, %v286
        %v288 = vand.u32 %v287, 4294901760
        %v289 = vsub.f32 %v287, %v288
        %v290 = vand.u32 %v289, 4294901760
        %291 = vmatmul.f32.gmra.mxu0 %v290
        %v292 = vpop.f32.mrf.mxu0
        %v293 = vadd.f32 0.0, %v292
        %294 = vdwg.mxu0
        %295 = vmatpush.msra.mxu0 0.0
        %296 = vmatpush.msra.mxu0 0.0
        %297 = vmatpush.msra.mxu0 0.0
        %298 = vmatpush.msra.mxu0 0.0
        %299 = vmatpush.msra.mxu0 0.0
        %300 = vmatpush.msra.mxu0 0.0
        %301 = vmatpush.msra.mxu0 0.0
        %302 = vmatpush.msra.mxu0 0.0
        %303 = vmatpush.msra.mxu0 0.0
        %304 = vmatpush.msra.mxu0 0.0
        %305 = vmatpush.msra.mxu0 0.0
        %306 = vmatpush.msra.mxu0 0.0
        %307 = vmatpush.msra.mxu0 0.0
        %308 = vmatpush.msra.mxu0 0.0
        %v309 = vand.u32 %v230, 4294901760
        %v310 = vsub.f32 %v230, %v309
        %v311 = vand.u32 %v310, 4294901760
        %v312 = vsub.f32 %v310, %v311
        %v313 = vand.u32 %v312, 4294901760
        %314 = vmatpush.msra.mxu0 %v313
        %v315 = vand.u32 %v229, 4294901760
        %v316 = vsub.f32 %v229, %v315
        %v317 = vand.u32 %v316, 4294901760
        %v318 = vsub.f32 %v316, %v317
        %v319 = vand.u32 %v318, 4294901760
        %320 = vmatpush.msra.mxu0 %v319
        %v321 = vand.u32 %v233, 4294901760
        %322 = vmatmul.f32.gmra.mxu0 %v321
        %v323 = vpop.f32.mrf.mxu0
        %v324 = vadd.f32 %v269, %v323
        %v325 = vand.u32 %v236, 4294901760
        %326 = vmatmul.f32.gmra.mxu0 %v325
        %v327 = vpop.f32.mrf.mxu0
        %v328 = vadd.f32 %v277, %v327
        %v329 = vand.u32 %v239, 4294901760
        %330 = vmatmul.f32.gmra.mxu0 %v329
        %v331 = vpop.f32.mrf.mxu0
        %v332 = vadd.f32 %v285, %v331
        %v333 = vand.u32 %v242, 4294901760
        %334 = vmatmul.f32.gmra.mxu0 %v333
        %v335 = vpop.f32.mrf.mxu0
        %v336 = vadd.f32 %v293, %v335
        %337 = vdwg.mxu0
        %338 = vmatpush.msra.mxu0 0.0
        %339 = vmatpush.msra.mxu0 0.0
        %340 = vmatpush.msra.mxu0 0.0
        %341 = vmatpush.msra.mxu0 0.0
        %342 = vmatpush.msra.mxu0 0.0
        %343 = vmatpush.msra.mxu0 0.0
        %344 = vmatpush.msra.mxu0 0.0
        %345 = vmatpush.msra.mxu0 0.0
        %346 = vmatpush.msra.mxu0 0.0
        %347 = vmatpush.msra.mxu0 0.0
        %348 = vmatpush.msra.mxu0 0.0
        %349 = vmatpush.msra.mxu0 0.0
        %350 = vmatpush.msra.mxu0 0.0
        %351 = vmatpush.msra.mxu0 0.0
        %v352 = vand.u32 %v230, 4294901760
        %v353 = vsub.f32 %v230, %v352
        %354 = vmatpush.msra.mxu0 %v353
        %v355 = vand.u32 %v229, 4294901760
        %v356 = vsub.f32 %v229, %v355
        %357 = vmatpush.msra.mxu0 %v356
        %v358 = vand.u32 %v233, 4294901760
        %v359 = vsub.f32 %v233, %v358
        %360 = vmatmul.f32.gmra.mxu0 %v359
        %v361 = vpop.f32.mrf.mxu0
        %v362 = vadd.f32 %v324, %v361
        %v363 = vand.u32 %v236, 4294901760
        %v364 = vsub.f32 %v236, %v363
        %365 = vmatmul.f32.gmra.mxu0 %v364
        %v366 = vpop.f32.mrf.mxu0
        %v367 = vadd.f32 %v328, %v366
        %v368 = vand.u32 %v239, 4294901760
        %v369 = vsub.f32 %v239, %v368
        %370 = vmatmul.f32.gmra.mxu0 %v369
        %v371 = vpop.f32.mrf.mxu0
        %v372 = vadd.f32 %v332, %v371
        %v373 = vand.u32 %v242, 4294901760
        %v374 = vsub.f32 %v242, %v373
        %375 = vmatmul.f32.gmra.mxu0 %v374
        %v376 = vpop.f32.mrf.mxu0
        %v377 = vadd.f32 %v336, %v376
        %378 = vdwg.mxu0
        %379 = vmatpush.msra.mxu0 0.0
        %380 = vmatpush.msra.mxu0 0.0
        %381 = vmatpush.msra.mxu0 0.0
        %382 = vmatpush.msra.mxu0 0.0
        %383 = vmatpush.msra.mxu0 0.0
        %384 = vmatpush.msra.mxu0 0.0
        %385 = vmatpush.msra.mxu0 0.0
        %386 = vmatpush.msra.mxu0 0.0
        %387 = vmatpush.msra.mxu0 0.0
        %388 = vmatpush.msra.mxu0 0.0
        %389 = vmatpush.msra.mxu0 0.0
        %390 = vmatpush.msra.mxu0 0.0
        %391 = vmatpush.msra.mxu0 0.0
        %392 = vmatpush.msra.mxu0 0.0
        %v393 = vand.u32 %v230, 4294901760
        %394 = vmatpush.msra.mxu0 %v393
        %v395 = vand.u32 %v229, 4294901760
        %396 = vmatpush.msra.mxu0 %v395
        %v397 = vand.u32 %v233, 4294901760
        %v398 = vsub.f32 %v233, %v397
        %v399 = vand.u32 %v398, 4294901760
        %400 = vmatmul.f32.gmra.mxu0 %v399
        %v401 = vpop.f32.mrf.mxu0
        %v402 = vadd.f32 %v362, %v401
        %v403 = vand.u32 %v236, 4294901760
        %v404 = vsub.f32 %v236, %v403
        %v405 = vand.u32 %v404, 4294901760
        %406 = vmatmul.f32.gmra.mxu0 %v405
        %v407 = vpop.f32.mrf.mxu0
        %v408 = vadd.f32 %v367, %v407
        %v409 = vand.u32 %v239, 4294901760
        %v410 = vsub.f32 %v239, %v409
        %v411 = vand.u32 %v410, 4294901760
        %412 = vmatmul.f32.gmra.mxu0 %v411
        %v413 = vpop.f32.mrf.mxu0
        %v414 = vadd.f32 %v372, %v413
        %v415 = vand.u32 %v242, 4294901760
        %v416 = vsub.f32 %v242, %v415
        %v417 = vand.u32 %v416, 4294901760
        %418 = vmatmul.f32.gmra.mxu0 %v417
        %v419 = vpop.f32.mrf.mxu0
        %v420 = vadd.f32 %v377, %v419
        %421 = vdwg.mxu0
        %422 = vmatpush.msra.mxu0 0.0
        %423 = vmatpush.msra.mxu0 0.0
        %424 = vmatpush.msra.mxu0 0.0
        %425 = vmatpush.msra.mxu0 0.0
        %426 = vmatpush.msra.mxu0 0.0
        %427 = vmatpush.msra.mxu0 0.0
        %428 = vmatpush.msra.mxu0 0.0
        %429 = vmatpush.msra.mxu0 0.0
        %430 = vmatpush.msra.mxu0 0.0
        %431 = vmatpush.msra.mxu0 0.0
        %432 = vmatpush.msra.mxu0 0.0
        %433 = vmatpush.msra.mxu0 0.0
        %434 = vmatpush.msra.mxu0 0.0
        %435 = vmatpush.msra.mxu0 0.0
        %v436 = vand.u32 %v230, 4294901760
        %v437 = vsub.f32 %v230, %v436
        %v438 = vand.u32 %v437, 4294901760
        %439 = vmatpush.msra.mxu0 %v438
        %v440 = vand.u32 %v229, 4294901760
        %v441 = vsub.f32 %v229, %v440
        %v442 = vand.u32 %v441, 4294901760
        %443 = vmatpush.msra.mxu0 %v442
        %v444 = vand.u32 %v233, 4294901760
        %445 = vmatmul.f32.gmra.mxu0 %v444
        %v446 = vpop.f32.mrf.mxu0
        %v447 = vadd.f32 %v402, %v446
        %v448 = vand.u32 %v236, 4294901760
        %449 = vmatmul.f32.gmra.mxu0 %v448
        %v450 = vpop.f32.mrf.mxu0
        %v451 = vadd.f32 %v408, %v450
        %v452 = vand.u32 %v239, 4294901760
        %453 = vmatmul.f32.gmra.mxu0 %v452
        %v454 = vpop.f32.mrf.mxu0
        %v455 = vadd.f32 %v414, %v454
        %v456 = vand.u32 %v242, 4294901760
        %457 = vmatmul.f32.gmra.mxu0 %v456
        %v458 = vpop.f32.mrf.mxu0
        %v459 = vadd.f32 %v420, %v458
        %460 = vdwg.mxu0
        %461 = vmatpush.msra.mxu0 0.0
        %462 = vmatpush.msra.mxu0 0.0
        %463 = vmatpush.msra.mxu0 0.0
        %464 = vmatpush.msra.mxu0 0.0
        %465 = vmatpush.msra.mxu0 0.0
        %466 = vmatpush.msra.mxu0 0.0
        %467 = vmatpush.msra.mxu0 0.0
        %468 = vmatpush.msra.mxu0 0.0
        %469 = vmatpush.msra.mxu0 0.0
        %470 = vmatpush.msra.mxu0 0.0
        %471 = vmatpush.msra.mxu0 0.0
        %472 = vmatpush.msra.mxu0 0.0
        %473 = vmatpush.msra.mxu0 0.0
        %474 = vmatpush.msra.mxu0 0.0
        %v475 = vand.u32 %v230, 4294901760
        %476 = vmatpush.msra.mxu0 %v475
        %v477 = vand.u32 %v229, 4294901760
        %478 = vmatpush.msra.mxu0 %v477
        %v479 = vand.u32 %v233, 4294901760
        %480 = vmatmul.f32.gmra.mxu0 %v479
        %v481 = vpop.f32.mrf.mxu0
        %v482 = vadd.f32 %v447, %v481
        %v483 = vand.u32 %v236, 4294901760
        %484 = vmatmul.f32.gmra.mxu0 %v483
        %v485 = vpop.f32.mrf.mxu0
        %v486 = vadd.f32 %v451, %v485
        %v487 = vand.u32 %v239, 4294901760
        %488 = vmatmul.f32.gmra.mxu0 %v487
        %v489 = vpop.f32.mrf.mxu0
        %v490 = vadd.f32 %v455, %v489
        %v491 = vand.u32 %v242, 4294901760
        %492 = vmatmul.f32.gmra.mxu0 %v491
        %v493 = vpop.f32.mrf.mxu0
        %v494 = vadd.f32 %v459, %v493
        %495 = vdwg.mxu0
        %496 = vxpose.xlu0.b32.start [1/16] %v482, 128
        %497 = vxpose.xlu0.b32.cont [2/16] %v486, 128
        %498 = vxpose.xlu0.b32.cont [3/16] 0.0, 128
        %499 = vxpose.xlu0.b32.cont [4/16] 0.0, 128
        %500 = vxpose.xlu0.b32.cont [5/16] 0.0, 128
        %501 = vxpose.xlu0.b32.cont [6/16] 0.0, 128
        %502 = vxpose.xlu0.b32.cont [7/16] 0.0, 128
        %503 = vxpose.xlu0.b32.cont [8/16] 0.0, 128
        %504 = vxpose.xlu0.b32.cont [9/16] 0.0, 128
        %505 = vxpose.xlu0.b32.cont [10/16] 0.0, 128
        %506 = vxpose.xlu0.b32.cont [11/16] 0.0, 128
        %507 = vxpose.xlu0.b32.cont [12/16] 0.0, 128
        %508 = vxpose.xlu0.b32.cont [13/16] 0.0, 128
        %509 = vxpose.xlu0.b32.cont [14/16] 0.0, 128
        %510 = vxpose.xlu0.b32.cont [15/16] 0.0, 128
        %511 = vxpose.xlu0.b32.end [16/16] 0.0, 128
        %v512 = vpop.trf.xlu0
        %v513 = vpop.trf.xlu0
        %v514 = vpop.trf.xlu0
        %v515 = vpop.trf.xlu0
        %v516 = vpop.trf.xlu0
        %v517 = vpop.trf.xlu0
        %v518 = vpop.trf.xlu0
        %v519 = vpop.trf.xlu0
        %v520 = vpop.trf.xlu0
        %v521 = vpop.trf.xlu0
        %v522 = vpop.trf.xlu0
        %v523 = vpop.trf.xlu0
        %v524 = vpop.trf.xlu0
        %v525 = vpop.trf.xlu0
        %v526 = vpop.trf.xlu0
        %v527 = vpop.trf.xlu0
        %528 = vxpose.xlu0.b32.start [1/16] %v490, 128
        %529 = vxpose.xlu0.b32.cont [2/16] %v494, 128
        %530 = vxpose.xlu0.b32.cont [3/16] 0.0, 128
        %531 = vxpose.xlu0.b32.cont [4/16] 0.0, 128
        %532 = vxpose.xlu0.b32.cont [5/16] 0.0, 128
        %533 = vxpose.xlu0.b32.cont [6/16] 0.0, 128
        %534 = vxpose.xlu0.b32.cont [7/16] 0.0, 128
        %535 = vxpose.xlu0.b32.cont [8/16] 0.0, 128
        %536 = vxpose.xlu0.b32.cont [9/16] 0.0, 128
        %537 = vxpose.xlu0.b32.cont [10/16] 0.0, 128
        %538 = vxpose.xlu0.b32.cont [11/16] 0.0, 128
        %539 = vxpose.xlu0.b32.cont [12/16] 0.0, 128
        %540 = vxpose.xlu0.b32.cont [13/16] 0.0, 128
        %541 = vxpose.xlu0.b32.cont [14/16] 0.0, 128
        %542 = vxpose.xlu0.b32.cont [15/16] 0.0, 128
        %543 = vxpose.xlu0.b32.end [16/16] 0.0, 128
        %v544 = vpop.trf.xlu0
        %v545 = vpop.trf.xlu0
        %v546 = vpop.trf.xlu0
        %v547 = vpop.trf.xlu0
        %v548 = vpop.trf.xlu0
        %v549 = vpop.trf.xlu0
        %v550 = vpop.trf.xlu0
        %v551 = vpop.trf.xlu0
        %v552 = vpop.trf.xlu0
        %v553 = vpop.trf.xlu0
        %v554 = vpop.trf.xlu0
        %v555 = vpop.trf.xlu0
        %v556 = vpop.trf.xlu0
        %v557 = vpop.trf.xlu0
        %v558 = vpop.trf.xlu0
        %v559 = vpop.trf.xlu0
        %v560 = vld [vmem:[#allocation2] sm:$0xff]
        %v561 = vld [vmem:[#allocation2 + $0x8] sm:$0xff]
        %v563 = vsel %vm231, %v512, 0
        %v566 = vsel %vm231, %v544, 0
        %568 = vmatpush.msra.mxu0 0.0
        %569 = vmatpush.msra.mxu0 0.0
        %570 = vmatpush.msra.mxu0 0.0
        %571 = vmatpush.msra.mxu0 0.0
        %572 = vmatpush.msra.mxu0 0.0
        %573 = vmatpush.msra.mxu0 0.0
        %574 = vmatpush.msra.mxu0 0.0
        %575 = vmatpush.msra.mxu0 0.0
        %576 = vmatpush.msra.mxu0 0.0
        %577 = vmatpush.msra.mxu0 0.0
        %578 = vmatpush.msra.mxu0 0.0
        %579 = vmatpush.msra.mxu0 0.0
        %580 = vmatpush.msra.mxu0 0.0
        %581 = vmatpush.msra.mxu0 0.0
        %v582 = vand.u32 %v561, 4294901760
        %583 = vmatpush.msra.mxu0 %v582
        %v584 = vand.u32 %v560, 4294901760
        %585 = vmatpush.msra.mxu0 %v584
        %v586 = vand.u32 %v563, 4294901760
        %v587 = vsub.f32 %v563, %v586
        %v588 = vand.u32 %v587, 4294901760
        %v589 = vsub.f32 %v587, %v588
        %v590 = vand.u32 %v589, 4294901760
        %591 = vmatmul.f32.gmra.mxu0 %v590
        %v592 = vpop.f32.mrf.mxu0
        %v593 = vadd.f32 0.0, %v592
        %v594 = vand.u32 %v566, 4294901760
        %v595 = vsub.f32 %v566, %v594
        %v596 = vand.u32 %v595, 4294901760
        %v597 = vsub.f32 %v595, %v596
        %v598 = vand.u32 %v597, 4294901760
        %599 = vmatmul.f32.gmra.mxu0 %v598
        %v600 = vpop.f32.mrf.mxu0
        %v601 = vadd.f32 0.0, %v600
        %602 = vdwg.mxu0
        %603 = vmatpush.msra.mxu0 0.0
        %604 = vmatpush.msra.mxu0 0.0
        %605 = vmatpush.msra.mxu0 0.0
        %606 = vmatpush.msra.mxu0 0.0
        %607 = vmatpush.msra.mxu0 0.0
        %608 = vmatpush.msra.mxu0 0.0
        %609 = vmatpush.msra.mxu0 0.0
        %610 = vmatpush.msra.mxu0 0.0
        %611 = vmatpush.msra.mxu0 0.0
        %612 = vmatpush.msra.mxu0 0.0
        %613 = vmatpush.msra.mxu0 0.0
        %614 = vmatpush.msra.mxu0 0.0
        %615 = vmatpush.msra.mxu0 0.0
        %616 = vmatpush.msra.mxu0 0.0
        %v617 = vand.u32 %v561, 4294901760
        %v618 = vsub.f32 %v561, %v617
        %v619 = vand.u32 %v618, 4294901760
        %v620 = vsub.f32 %v618, %v619
        %v621 = vand.u32 %v620, 4294901760
        %622 = vmatpush.msra.mxu0 %v621
        %v623 = vand.u32 %v560, 4294901760
        %v624 = vsub.f32 %v560, %v623
        %v625 = vand.u32 %v624, 4294901760
        %v626 = vsub.f32 %v624, %v625
        %v627 = vand.u32 %v626, 4294901760
        %628 = vmatpush.msra.mxu0 %v627
        %v629 = vand.u32 %v563, 4294901760
        %630 = vmatmul.f32.gmra.mxu0 %v629
        %v631 = vpop.f32.mrf.mxu0
        %v632 = vadd.f32 %v593, %v631
        %v633 = vand.u32 %v566, 4294901760
        %634 = vmatmul.f32.gmra.mxu0 %v633
        %v635 = vpop.f32.mrf.mxu0
        %v636 = vadd.f32 %v601, %v635
        %637 = vdwg.mxu0
        %638 = vmatpush.msra.mxu0 0.0
        %639 = vmatpush.msra.mxu0 0.0
        %640 = vmatpush.msra.mxu0 0.0
        %641 = vmatpush.msra.mxu0 0.0
        %642 = vmatpush.msra.mxu0 0.0
        %643 = vmatpush.msra.mxu0 0.0
        %644 = vmatpush.msra.mxu0 0.0
        %645 = vmatpush.msra.mxu0 0.0
        %646 = vmatpush.msra.mxu0 0.0
        %647 = vmatpush.msra.mxu0 0.0
        %648 = vmatpush.msra.mxu0 0.0
        %649 = vmatpush.msra.mxu0 0.0
        %650 = vmatpush.msra.mxu0 0.0
        %651 = vmatpush.msra.mxu0 0.0
        %v652 = vand.u32 %v561, 4294901760
        %v653 = vsub.f32 %v561, %v652
        %654 = vmatpush.msra.mxu0 %v653
        %v655 = vand.u32 %v560, 4294901760
        %v656 = vsub.f32 %v560, %v655
        %657 = vmatpush.msra.mxu0 %v656
        %v658 = vand.u32 %v563, 4294901760
        %v659 = vsub.f32 %v563, %v658
        %660 = vmatmul.f32.gmra.mxu0 %v659
        %v661 = vpop.f32.mrf.mxu0
        %v662 = vadd.f32 %v632, %v661
        %v663 = vand.u32 %v566, 4294901760
        %v664 = vsub.f32 %v566, %v663
        %665 = vmatmul.f32.gmra.mxu0 %v664
        %v666 = vpop.f32.mrf.mxu0
        %v667 = vadd.f32 %v636, %v666
        %668 = vdwg.mxu0
        %669 = vmatpush.msra.mxu0 0.0
        %670 = vmatpush.msra.mxu0 0.0
        %671 = vmatpush.msra.mxu0 0.0
        %672 = vmatpush.msra.mxu0 0.0
        %673 = vmatpush.msra.mxu0 0.0
        %674 = vmatpush.msra.mxu0 0.0
        %675 = vmatpush.msra.mxu0 0.0
        %676 = vmatpush.msra.mxu0 0.0
        %677 = vmatpush.msra.mxu0 0.0
        %678 = vmatpush.msra.mxu0 0.0
        %679 = vmatpush.msra.mxu0 0.0
        %680 = vmatpush.msra.mxu0 0.0
        %681 = vmatpush.msra.mxu0 0.0
        %682 = vmatpush.msra.mxu0 0.0
        %v683 = vand.u32 %v561, 4294901760
        %684 = vmatpush.msra.mxu0 %v683
        %v685 = vand.u32 %v560, 4294901760
        %686 = vmatpush.msra.mxu0 %v685
        %v687 = vand.u32 %v563, 4294901760
        %v688 = vsub.f32 %v563, %v687
        %v689 = vand.u32 %v688, 4294901760
        %690 = vmatmul.f32.gmra.mxu0 %v689
        %v691 = vpop.f32.mrf.mxu0
        %v692 = vadd.f32 %v662, %v691
        %v693 = vand.u32 %v566, 4294901760
        %v694 = vsub.f32 %v566, %v693
        %v695 = vand.u32 %v694, 4294901760
        %696 = vmatmul.f32.gmra.mxu0 %v695
        %v697 = vpop.f32.mrf.mxu0
        %v698 = vadd.f32 %v667, %v697
        %699 = vdwg.mxu0
        %700 = vmatpush.msra.mxu0 0.0
        %701 = vmatpush.msra.mxu0 0.0
        %702 = vmatpush.msra.mxu0 0.0
        %703 = vmatpush.msra.mxu0 0.0
        %704 = vmatpush.msra.mxu0 0.0
        %705 = vmatpush.msra.mxu0 0.0
        %706 = vmatpush.msra.mxu0 0.0
        %707 = vmatpush.msra.mxu0 0.0
        %708 = vmatpush.msra.mxu0 0.0
        %709 = vmatpush.msra.mxu0 0.0
        %710 = vmatpush.msra.mxu0 0.0
        %711 = vmatpush.msra.mxu0 0.0
        %712 = vmatpush.msra.mxu0 0.0
        %713 = vmatpush.msra.mxu0 0.0
        %v714 = vand.u32 %v561, 4294901760
        %v715 = vsub.f32 %v561, %v714
        %v716 = vand.u32 %v715, 4294901760
        %717 = vmatpush.msra.mxu0 %v716
        %v718 = vand.u32 %v560, 4294901760
        %v719 = vsub.f32 %v560, %v718
        %v720 = vand.u32 %v719, 4294901760
        %721 = vmatpush.msra.mxu0 %v720
        %v722 = vand.u32 %v563, 4294901760
        %723 = vmatmul.f32.gmra.mxu0 %v722
        %v724 = vpop.f32.mrf.mxu0
        %v725 = vadd.f32 %v692, %v724
        %v726 = vand.u32 %v566, 4294901760
        %727 = vmatmul.f32.gmra.mxu0 %v726
        %v728 = vpop.f32.mrf.mxu0
        %v729 = vadd.f32 %v698, %v728
        %730 = vdwg.mxu0
        %731 = vmatpush.msra.mxu0 0.0
        %732 = vmatpush.msra.mxu0 0.0
        %733 = vmatpush.msra.mxu0 0.0
        %734 = vmatpush.msra.mxu0 0.0
        %735 = vmatpush.msra.mxu0 0.0
        %736 = vmatpush.msra.mxu0 0.0
        %737 = vmatpush.msra.mxu0 0.0
        %738 = vmatpush.msra.mxu0 0.0
        %739 = vmatpush.msra.mxu0 0.0
        %740 = vmatpush.msra.mxu0 0.0
        %741 = vmatpush.msra.mxu0 0.0
        %742 = vmatpush.msra.mxu0 0.0
        %743 = vmatpush.msra.mxu0 0.0
        %744 = vmatpush.msra.mxu0 0.0
        %v745 = vand.u32 %v561, 4294901760
        %746 = vmatpush.msra.mxu0 %v745
        %v747 = vand.u32 %v560, 4294901760
        %748 = vmatpush.msra.mxu0 %v747
        %v749 = vand.u32 %v563, 4294901760
        %750 = vmatmul.f32.gmra.mxu0 %v749
        %v751 = vpop.f32.mrf.mxu0
        %v752 = vadd.f32 %v725, %v751
        %v753 = vand.u32 %v566, 4294901760
        %754 = vmatmul.f32.gmra.mxu0 %v753
        %v755 = vpop.f32.mrf.mxu0
        %v756 = vadd.f32 %v729, %v755
        %757 = vdwg.mxu0
        %758 = vxpose.xlu0.b32.start [1/16] %v752, 128
        %759 = vxpose.xlu0.b32.cont [2/16] 0.0, 128
        %760 = vxpose.xlu0.b32.cont [3/16] 0.0, 128
        %761 = vxpose.xlu0.b32.cont [4/16] 0.0, 128
        %762 = vxpose.xlu0.b32.cont [5/16] 0.0, 128
        %763 = vxpose.xlu0.b32.cont [6/16] 0.0, 128
        %764 = vxpose.xlu0.b32.cont [7/16] 0.0, 128
        %765 = vxpose.xlu0.b32.cont [8/16] 0.0, 128
        %766 = vxpose.xlu0.b32.cont [9/16] 0.0, 128
        %767 = vxpose.xlu0.b32.cont [10/16] 0.0, 128
        %768 = vxpose.xlu0.b32.cont [11/16] 0.0, 128
        %769 = vxpose.xlu0.b32.cont [12/16] 0.0, 128
        %770 = vxpose.xlu0.b32.cont [13/16] 0.0, 128
        %771 = vxpose.xlu0.b32.cont [14/16] 0.0, 128
        %772 = vxpose.xlu0.b32.cont [15/16] 0.0, 128
        %773 = vxpose.xlu0.b32.end [16/16] 0.0, 128
        %v774 = vpop.trf.xlu0
        %v775 = vpop.trf.xlu0
        %v776 = vpop.trf.xlu0
        %v777 = vpop.trf.xlu0
        %v778 = vpop.trf.xlu0
        %v779 = vpop.trf.xlu0
        %v780 = vpop.trf.xlu0
        %v781 = vpop.trf.xlu0
        %v782 = vpop.trf.xlu0
        %v783 = vpop.trf.xlu0
        %v784 = vpop.trf.xlu0
        %v785 = vpop.trf.xlu0
        %v786 = vpop.trf.xlu0
        %v787 = vpop.trf.xlu0
        %v788 = vpop.trf.xlu0
        %v789 = vpop.trf.xlu0
        %790 = vxpose.xlu0.b32.start [1/16] %v756, 128
        %791 = vxpose.xlu0.b32.cont [2/16] 0.0, 128
        %792 = vxpose.xlu0.b32.cont [3/16] 0.0, 128
        %793 = vxpose.xlu0.b32.cont [4/16] 0.0, 128
        %794 = vxpose.xlu0.b32.cont [5/16] 0.0, 128
        %795 = vxpose.xlu0.b32.cont [6/16] 0.0, 128
        %796 = vxpose.xlu0.b32.cont [7/16] 0.0, 128
        %797 = vxpose.xlu0.b32.cont [8/16] 0.0, 128
        %798 = vxpose.xlu0.b32.cont [9/16] 0.0, 128
        %799 = vxpose.xlu0.b32.cont [10/16] 0.0, 128
        %800 = vxpose.xlu0.b32.cont [11/16] 0.0, 128
        %801 = vxpose.xlu0.b32.cont [12/16] 0.0, 128
        %802 = vxpose.xlu0.b32.cont [13/16] 0.0, 128
        %803 = vxpose.xlu0.b32.cont [14/16] 0.0, 128
        %804 = vxpose.xlu0.b32.cont [15/16] 0.0, 128
        %805 = vxpose.xlu0.b32.end [16/16] 0.0, 128
        %v806 = vpop.trf.xlu0
        %v807 = vpop.trf.xlu0
        %v808 = vpop.trf.xlu0
        %v809 = vpop.trf.xlu0
        %v810 = vpop.trf.xlu0
        %v811 = vpop.trf.xlu0
        %v812 = vpop.trf.xlu0
        %v813 = vpop.trf.xlu0
        %v814 = vpop.trf.xlu0
        %v815 = vpop.trf.xlu0
        %v816 = vpop.trf.xlu0
        %v817 = vpop.trf.xlu0
        %v818 = vpop.trf.xlu0
        %v819 = vpop.trf.xlu0
        %v820 = vpop.trf.xlu0
        %v821 = vpop.trf.xlu0
        %vm822 = vcmask 64512
        %823 = vst.msk [vmem:[%s222] sm:$0xff] %vm822, %v774
        %824 = vst.msk [vmem:[%s222 + $0x8] sm:$0xff] %vm822, %v806
        %s825 = sand.u32 %s95, 1
        %s826 = scalar_lea.sflag [#allocation4], %s825
        %s827 = sand.u32 %s95, 1
        %s828 = smul.addr %s827, 16
        %s829 = scalar_lea.vmem [#allocation8], %s828
        // Predicated region
        $region45: #{downsample.1} parent=31 // pred_check
          %p830 = pneg %p105
        $region46: #{downsample.1} parent=31 // pred_check_branch
          %832 = sbr.rel (%p830) target = $region48
        $region47: #{downsample.1} parent=31 // pred_region
          %s833 = smul.u32 2, %s19
          %835 = vsyncadd %s826, 0
          %s836 = smul.addr %s833, 8
          %s837 = scalar_lea.hbm %s3, %s836
          %s838 = sshll.u32 %s829, 4
          %s839 = int_to_ptr.vmem [resolvable:$true] %s838
          %s840 = sshll.u32 %s837, 4
          %s841 = int_to_ptr.hbm [resolvable:$true] %s840
          %846 = dma.vmem_to_hbm [thread:$0]  %s839, 256, %s841, %s826, 128, 128, 8
        $region48: #{downsample.1} parent=31 // pred_fallthru
          _
      $region32: #{downsample.1} parent=5 // pred_fallthru
        _
      %p847 = scmp.le.s32.totalorder 2, %s14
      // Predicated region
      $region49: #{downsample.1} parent=5 // pred_check
        %p848 = pneg %p847
      $region50: #{downsample.1} parent=5 // pred_check_branch
        %850 = sbr.rel (%p848) target = $region52
      $region51: #{downsample.1} parent=5 // pred_region
        %s851 = ssub.s32 %s14, 2
        // Predicated region
        $region53: #{downsample.1} parent=51 // pred_check
          %p852 = pneg %p111
        $region54: #{downsample.1} parent=51 // pred_check_branch
          %854 = sbr.rel (%p852) target = $region56
        $region55: #{downsample.1} parent=51 // pred_region
          %s855 = sand.u32 %s96, 1
          %s856 = scalar_lea.sflag [#allocation4], %s855
          %s857 = sand.u32 %s96, 1
          %s858 = smul.addr %s857, 16
          %s859 = scalar_lea.vmem [#allocation8], %s858
          %861 = dma.done %s856, 256
        $region56: #{downsample.1} parent=51 // pred_fallthru
          _
      $region52: #{downsample.1} parent=5 // pred_fallthru
        _
    $region6: #{downsample.1} parent=1 // loop_footer
      %s18 = sadd.s32 1, %s14
    $region7: #{downsample.1} parent=1 // loop_footer_branch
      %13 = sbr.rel target = $region3
    $region8: #{downsample.1} parent=1 // loop_exit
      _
    %862 = vsyncpa [#allocation3], 1
    %s863 = scalar_lea.sflag [#allocation3], 1
    %864 = vsyncpa %s863, 1
    %865 = vsyncpa [#allocation6], 1
    %866 = vsyncpa [#allocation4], 1
    %s867 = scalar_lea.sflag [#allocation4], 1
    %868 = vsyncpa %s867, 1

</llo_original>
